<compile_context>
chip_gen: v7x
topology: tpu7x:2x2x1
jax: 0.10.0
libtpu: 0.0.40
codegen_flags: <defaults>
</compile_context>

<pallas_src>
import jax
import jax.numpy as jnp
from jax.experimental import pallas as pl
from jax.experimental.pallas import tpu as pltpu

LANE = 128


def _choose_s_tile(s_total, target=2048):
    """Rows-of-128 per spatial tile.

    target=2048 -> 2048*128*4B = 1 MiB per channel, 4 MiB per stream tile at C=4;
    2 buffers x 3 streams ~ 24 MiB VMEM (fits v7x's 64 MiB with headroom).
    """
    if s_total <= target:
        return s_total                 # full-extent block is always legal
    return (target // 8) * 8           # multiple of 8 sublanes when tiled


def _make_fused_kernel(C):
    """Fused pointwise maps x->c and x->d on a sublane-dense (C, S, 128) tile."""

    def kernel(x_ref, wc_ref, bc_ref, wd_ref, bd_ref, c_ref, d_ref):
        # x_ref / c_ref / d_ref : (C, S, 128) VMEM tiles.
        # wc/wd : (C_in, C_out) SMEM;  bc/bd : (C,) SMEM.
        xs = [x_ref[ci] for ci in range(C)]          # each (S, 128): full vregs
        for co in range(C):
            acc_c = xs[0] * wc_ref[0, co]
            acc_d = xs[0] * wd_ref[0, co]
            for ci in range(1, C):
                acc_c = acc_c + xs[ci] * wc_ref[ci, co]
                acc_d = acc_d + xs[ci] * wd_ref[ci, co]
            # Direct per-channel full-tile stores (no concatenate / relayout).
            c_ref[co] = (acc_c + bc_ref[co]).astype(c_ref.dtype)
            d_ref[co] = (acc_d + bd_ref[co]).astype(d_ref.dtype)

    return kernel


def abcd_forward(x_nchw, params):
    """x_nchw: (N, C, H, W) float32.  Returns (c, d) in NCHW."""
    N, C, H, W = x_nchw.shape
    HW = H * W

    # --- pre-fuse the statically-resolved chain:  c = C(B(A(x))), d = D(B(A(x))) ---
    wa, ba = params["wa"], params["ba"]
    wb, bb = params["wb"], params["bb"]
    wab = wa @ wb
    bab = ba @ wb + bb
    wxc = wab @ params["wc"]
    bxc = bab @ params["wc"] + params["bc"]
    wxd = wab @ params["wd"]
    bxd = bab @ params["wd"] + params["bd"]

    # --- lane- and sublane-dense layout: (N,C,H,W) -> (N, C, S_total, 128) ---
    hw_pad = ((HW + LANE - 1) // LANE) * LANE
    x3 = x_nchw.reshape(N, C, HW)                    # free reshape, no transpose
    if hw_pad != HW:
        x3 = jnp.pad(x3, ((0, 0), (0, 0), (0, hw_pad - HW)))
    s_total = hw_pad // LANE
    x4 = x3.reshape(N, C, s_total, LANE)             # free reshape

    s_tile = _choose_s_tile(s_total)
    grid = (N, pl.cdiv(s_total, s_tile))             # partial last block masked by Pallas

    tile_spec = pl.BlockSpec((None, C, s_tile, LANE), lambda n, s: (n, 0, s, 0))
    smem_spec = pl.BlockSpec(memory_space=pltpu.MemorySpace.SMEM)

    flops = 4 * N * hw_pad * C * C                            # 2 fused layers x 2*C^2/pixel
    bytes_accessed = 4 * (3 * N * C * hw_pad + 2 * (C * C + C))

    c4, d4 = pl.pallas_call(
        _make_fused_kernel(C),
        out_shape=(jax.ShapeDtypeStruct((N, C, s_total, LANE), jnp.float32),
                   jax.ShapeDtypeStruct((N, C, s_total, LANE), jnp.float32)),
        grid_spec=pltpu.PrefetchScalarGridSpec(
            num_scalar_prefetch=0,
            grid=grid,
            in_specs=[tile_spec, smem_spec, smem_spec, smem_spec, smem_spec],
            out_specs=(tile_spec, tile_spec),
        ),
        compiler_params=pltpu.CompilerParams(
            dimension_semantics=("parallel", "parallel"),   # megacore sharding on v7x
            vmem_limit_bytes=48 * 1024 * 1024,              # <= v7x 64 MiB; > v6e 32 MiB default
        ),
        cost_estimate=pl.CostEstimate(flops=flops, transcendentals=0,
                                      bytes_accessed=bytes_accessed),
    )(x4, wxc, bxc, wxd, bxd)

    def back(v):
        v = v.reshape(N, C, hw_pad)
        if hw_pad != HW:
            v = v[:, :, :HW]
        return v.reshape(N, C, H, W)

    return back(c4), back(d4)


def init_params(key, C):
    """Deterministic parameter init for the four 1x1 Conv2d(C, C) submodules."""
    ks = jax.random.split(key, 8)
    scale = 1.0 / jnp.sqrt(jnp.float32(C))

    def w(k):  # (C_in, C_out)
        return jax.random.normal(k, (C, C), jnp.float32) * scale

    def b(k):  # (C,)
        return jax.random.normal(k, (C,), jnp.float32) * scale

    return {
        "wa": w(ks[0]), "ba": b(ks[1]),
        "wb": w(ks[2]), "bb": b(ks[3]),
        "wc": w(ks[4]), "bc": b(ks[5]),
        "wd": w(ks[6]), "bd": b(ks[7]),
    }


def reference_forward(x_nchw, params):
    """Pure-JAX reference reproducing the PyTorch control flow literally (no weight fusion)."""
    N, C, H, W = x_nchw.shape
    x2d = jnp.transpose(x_nchw, (0, 2, 3, 1)).reshape(-1, C)

    def A(v): return v @ params["wa"] + params["ba"]
    def B(v): return v @ params["wb"] + params["bb"]
    def Cm(v): return v @ params["wc"] + params["bc"]
    def D(v): return v @ params["wd"] + params["bd"]

    num_A_calls = 0
    num_B_calls = 0
    a = jnp.zeros_like(x2d); b = jnp.zeros_like(x2d)
    c = jnp.zeros_like(x2d); d = jnp.zeros_like(x2d)
    for _ in range(10):
        if num_A_calls == 0:
            a = A(x2d); num_A_calls += 1
        b = B(a); num_B_calls += 1
        if num_B_calls % 5 == 0:
            c = Cm(b)
        if num_B_calls % 10 == 0:
            d = D(b)
    to_nchw = lambda v: jnp.transpose(v.reshape(N, H, W, C), (0, 3, 1, 2))
    return to_nchw(c), to_nchw(d)


if __name__ == "__main__":
    key = jax.random.PRNGKey(0)
    k_x, k_p = jax.random.split(key)

    N, C, H, W = 2, 4, 16, 16
    x = jax.random.normal(k_x, (N, C, H, W), jnp.float32)
    params = init_params(k_p, C)

    c_out, d_out = jax.jit(abcd_forward)(x, params)
    jax.block_until_ready((c_out, d_out))

    c_ref, d_ref = reference_forward(x, params)
    assert c_out.shape == (N, C, H, W) and d_out.shape == (N, C, H, W)
    # Weight-chain fusion re-associates fp32 products; 1e-5 tolerance still holds.
    assert jnp.allclose(c_out, c_ref, atol=1e-5, rtol=1e-5)
    assert jnp.allclose(d_out, d_ref, atol=1e-5, rtol=1e-5)

    print("KERNEL_OK")
</pallas_src>

<mosaic_0001>
module attributes {stable_mosaic.version = 11 : i64} {
  func.func @kernel(%arg0: i32, %arg1: i32, %arg2: memref<1x4x2x128xf32, #tpu.memory_space<vmem>>, %arg3: memref<4x4xf32, #tpu.memory_space<smem>>, %arg4: memref<4xf32, #tpu.memory_space<smem>>, %arg5: memref<4x4xf32, #tpu.memory_space<smem>>, %arg6: memref<4xf32, #tpu.memory_space<smem>>, %arg7: memref<1x4x2x128xf32, #tpu.memory_space<vmem>>, %arg8: memref<1x4x2x128xf32, #tpu.memory_space<vmem>>) attributes {dimension_semantics = [#tpu.dimension_semantics<parallel>, #tpu.dimension_semantics<parallel>], iteration_bounds = array<i64: 2, 1>, scalar_prefetch = 0 : i64, scratch_operands = 0 : i64, tpu.core_type = #tpu.core_type<tc>, window_params = [{transform_indices = @transform_0, window_bounds = array<i64: 1, 4, 2, 128>}, {transform_indices = @transform_1, window_bounds = array<i64: 4, 4>}, {transform_indices = @transform_2, window_bounds = array<i64: 4>}, {transform_indices = @transform_3, window_bounds = array<i64: 4, 4>}, {transform_indices = @transform_4, window_bounds = array<i64: 4>}, {transform_indices = @transform_5, window_bounds = array<i64: 1, 4, 2, 128>}, {transform_indices = @transform_6, window_bounds = array<i64: 1, 4, 2, 128>}]} {
    %c0 = arith.constant 0 : index
    %c0_0 = arith.constant 0 : index
    %c0_1 = arith.constant 0 : index
    %c0_2 = arith.constant 0 : index
    %0 = vector.load %arg2[%c0, %c0_0, %c0_1, %c0_2] : memref<1x4x2x128xf32, #tpu.memory_space<vmem>>, vector<1x1x2x128xf32>
    %1 = vector.shape_cast %0 : vector<1x1x2x128xf32> to vector<2x128xf32>
    %c0_3 = arith.constant 0 : index
    %c1 = arith.constant 1 : index
    %c0_4 = arith.constant 0 : index
    %c0_5 = arith.constant 0 : index
    %2 = vector.load %arg2[%c0_3, %c1, %c0_4, %c0_5] : memref<1x4x2x128xf32, #tpu.memory_space<vmem>>, vector<1x1x2x128xf32>
    %3 = vector.shape_cast %2 : vector<1x1x2x128xf32> to vector<2x128xf32>
    %c0_6 = arith.constant 0 : index
    %c2 = arith.constant 2 : index
    %c0_7 = arith.constant 0 : index
    %c0_8 = arith.constant 0 : index
    %4 = vector.load %arg2[%c0_6, %c2, %c0_7, %c0_8] : memref<1x4x2x128xf32, #tpu.memory_space<vmem>>, vector<1x1x2x128xf32>
    %5 = vector.shape_cast %4 : vector<1x1x2x128xf32> to vector<2x128xf32>
    %c0_9 = arith.constant 0 : index
    %c3 = arith.constant 3 : index
    %c0_10 = arith.constant 0 : index
    %c0_11 = arith.constant 0 : index
    %6 = vector.load %arg2[%c0_9, %c3, %c0_10, %c0_11] : memref<1x4x2x128xf32, #tpu.memory_space<vmem>>, vector<1x1x2x128xf32>
    %7 = vector.shape_cast %6 : vector<1x1x2x128xf32> to vector<2x128xf32>
    %c0_12 = arith.constant 0 : index
    %c0_13 = arith.constant 0 : index
    %8 = memref.load %arg3[%c0_12, %c0_13] : memref<4x4xf32, #tpu.memory_space<smem>>
    %9 = vector.broadcast %8 : f32 to vector<2x128xf32>
    %10 = arith.mulf %1, %9 : vector<2x128xf32>
    %c0_14 = arith.constant 0 : index
    %c0_15 = arith.constant 0 : index
    %11 = memref.load %arg5[%c0_14, %c0_15] : memref<4x4xf32, #tpu.memory_space<smem>>
    %12 = vector.broadcast %11 : f32 to vector<2x128xf32>
    %13 = arith.mulf %1, %12 : vector<2x128xf32>
    %c1_16 = arith.constant 1 : index
    %c0_17 = arith.constant 0 : index
    %14 = memref.load %arg3[%c1_16, %c0_17] : memref<4x4xf32, #tpu.memory_space<smem>>
    %15 = vector.broadcast %14 : f32 to vector<2x128xf32>
    %16 = arith.mulf %3, %15 : vector<2x128xf32>
    %17 = arith.addf %10, %16 : vector<2x128xf32>
    %c1_18 = arith.constant 1 : index
    %c0_19 = arith.constant 0 : index
    %18 = memref.load %arg5[%c1_18, %c0_19] : memref<4x4xf32, #tpu.memory_space<smem>>
    %19 = vector.broadcast %18 : f32 to vector<2x128xf32>
    %20 = arith.mulf %3, %19 : vector<2x128xf32>
    %21 = arith.addf %13, %20 : vector<2x128xf32>
    %c2_20 = arith.constant 2 : index
    %c0_21 = arith.constant 0 : index
    %22 = memref.load %arg3[%c2_20, %c0_21] : memref<4x4xf32, #tpu.memory_space<smem>>
    %23 = vector.broadcast %22 : f32 to vector<2x128xf32>
    %24 = arith.mulf %5, %23 : vector<2x128xf32>
    %25 = arith.addf %17, %24 : vector<2x128xf32>
    %c2_22 = arith.constant 2 : index
    %c0_23 = arith.constant 0 : index
    %26 = memref.load %arg5[%c2_22, %c0_23] : memref<4x4xf32, #tpu.memory_space<smem>>
    %27 = vector.broadcast %26 : f32 to vector<2x128xf32>
    %28 = arith.mulf %5, %27 : vector<2x128xf32>
    %29 = arith.addf %21, %28 : vector<2x128xf32>
    %c3_24 = arith.constant 3 : index
    %c0_25 = arith.constant 0 : index
    %30 = memref.load %arg3[%c3_24, %c0_25] : memref<4x4xf32, #tpu.memory_space<smem>>
    %31 = vector.broadcast %30 : f32 to vector<2x128xf32>
    %32 = arith.mulf %7, %31 : vector<2x128xf32>
    %33 = arith.addf %25, %32 : vector<2x128xf32>
    %c3_26 = arith.constant 3 : index
    %c0_27 = arith.constant 0 : index
    %34 = memref.load %arg5[%c3_26, %c0_27] : memref<4x4xf32, #tpu.memory_space<smem>>
    %35 = vector.broadcast %34 : f32 to vector<2x128xf32>
    %36 = arith.mulf %7, %35 : vector<2x128xf32>
    %37 = arith.addf %29, %36 : vector<2x128xf32>
    %c0_28 = arith.constant 0 : index
    %38 = memref.load %arg4[%c0_28] : memref<4xf32, #tpu.memory_space<smem>>
    %39 = vector.broadcast %38 : f32 to vector<2x128xf32>
    %40 = arith.addf %33, %39 : vector<2x128xf32>
    %c0_29 = arith.constant 0 : index
    %c0_30 = arith.constant 0 : index
    %c0_31 = arith.constant 0 : index
    %c0_32 = arith.constant 0 : index
    %41 = vector.load %arg7[%c0_29, %c0_30, %c0_31, %c0_32] : memref<1x4x2x128xf32, #tpu.memory_space<vmem>>, vector<1x1x2x128xf32>
    %42 = vector.shape_cast %41 : vector<1x1x2x128xf32> to vector<2x128xf32>
    %43 = vector.shape_cast %40 : vector<2x128xf32> to vector<1x1x2x128xf32>
    tpu.vector_store %arg7[%c0_29, %c0_30, %c0_31, %c0_32], %43 {strides = array<i32>} : memref<1x4x2x128xf32, #tpu.memory_space<vmem>>, vector<1x1x2x128xf32>,
    %c0_33 = arith.constant 0 : index
    %44 = memref.load %arg6[%c0_33] : memref<4xf32, #tpu.memory_space<smem>>
    %45 = vector.broadcast %44 : f32 to vector<2x128xf32>
    %46 = arith.addf %37, %45 : vector<2x128xf32>
    %c0_34 = arith.constant 0 : index
    %c0_35 = arith.constant 0 : index
    %c0_36 = arith.constant 0 : index
    %c0_37 = arith.constant 0 : index
    %47 = vector.load %arg8[%c0_34, %c0_35, %c0_36, %c0_37] : memref<1x4x2x128xf32, #tpu.memory_space<vmem>>, vector<1x1x2x128xf32>
    %48 = vector.shape_cast %47 : vector<1x1x2x128xf32> to vector<2x128xf32>
    %49 = vector.shape_cast %46 : vector<2x128xf32> to vector<1x1x2x128xf32>
    tpu.vector_store %arg8[%c0_34, %c0_35, %c0_36, %c0_37], %49 {strides = array<i32>} : memref<1x4x2x128xf32, #tpu.memory_space<vmem>>, vector<1x1x2x128xf32>,
    %c0_38 = arith.constant 0 : index
    %c1_39 = arith.constant 1 : index
    %50 = memref.load %arg3[%c0_38, %c1_39] : memref<4x4xf32, #tpu.memory_space<smem>>
    %51 = vector.broadcast %50 : f32 to vector<2x128xf32>
    %52 = arith.mulf %1, %51 : vector<2x128xf32>
    %c0_40 = arith.constant 0 : index
    %c1_41 = arith.constant 1 : index
    %53 = memref.load %arg5[%c0_40, %c1_41] : memref<4x4xf32, #tpu.memory_space<smem>>
    %54 = vector.broadcast %53 : f32 to vector<2x128xf32>
    %55 = arith.mulf %1, %54 : vector<2x128xf32>
    %c1_42 = arith.constant 1 : index
    %c1_43 = arith.constant 1 : index
    %56 = memref.load %arg3[%c1_42, %c1_43] : memref<4x4xf32, #tpu.memory_space<smem>>
    %57 = vector.broadcast %56 : f32 to vector<2x128xf32>
    %58 = arith.mulf %3, %57 : vector<2x128xf32>
    %59 = arith.addf %52, %58 : vector<2x128xf32>
    %c1_44 = arith.constant 1 : index
    %c1_45 = arith.constant 1 : index
    %60 = memref.load %arg5[%c1_44, %c1_45] : memref<4x4xf32, #tpu.memory_space<smem>>
    %61 = vector.broadcast %60 : f32 to vector<2x128xf32>
    %62 = arith.mulf %3, %61 : vector<2x128xf32>
    %63 = arith.addf %55, %62 : vector<2x128xf32>
    %c2_46 = arith.constant 2 : index
    %c1_47 = arith.constant 1 : index
    %64 = memref.load %arg3[%c2_46, %c1_47] : memref<4x4xf32, #tpu.memory_space<smem>>
    %65 = vector.broadcast %64 : f32 to vector<2x128xf32>
    %66 = arith.mulf %5, %65 : vector<2x128xf32>
    %67 = arith.addf %59, %66 : vector<2x128xf32>
    %c2_48 = arith.constant 2 : index
    %c1_49 = arith.constant 1 : index
    %68 = memref.load %arg5[%c2_48, %c1_49] : memref<4x4xf32, #tpu.memory_space<smem>>
    %69 = vector.broadcast %68 : f32 to vector<2x128xf32>
    %70 = arith.mulf %5, %69 : vector<2x128xf32>
    %71 = arith.addf %63, %70 : vector<2x128xf32>
    %c3_50 = arith.constant 3 : index
    %c1_51 = arith.constant 1 : index
    %72 = memref.load %arg3[%c3_50, %c1_51] : memref<4x4xf32, #tpu.memory_space<smem>>
    %73 = vector.broadcast %72 : f32 to vector<2x128xf32>
    %74 = arith.mulf %7, %73 : vector<2x128xf32>
    %75 = arith.addf %67, %74 : vector<2x128xf32>
    %c3_52 = arith.constant 3 : index
    %c1_53 = arith.constant 1 : index
    %76 = memref.load %arg5[%c3_52, %c1_53] : memref<4x4xf32, #tpu.memory_space<smem>>
    %77 = vector.broadcast %76 : f32 to vector<2x128xf32>
    %78 = arith.mulf %7, %77 : vector<2x128xf32>
    %79 = arith.addf %71, %78 : vector<2x128xf32>
    %c1_54 = arith.constant 1 : index
    %80 = memref.load %arg4[%c1_54] : memref<4xf32, #tpu.memory_space<smem>>
    %81 = vector.broadcast %80 : f32 to vector<2x128xf32>
    %82 = arith.addf %75, %81 : vector<2x128xf32>
    %c0_55 = arith.constant 0 : index
    %c1_56 = arith.constant 1 : index
    %c0_57 = arith.constant 0 : index
    %c0_58 = arith.constant 0 : index
    %83 = vector.load %arg7[%c0_55, %c1_56, %c0_57, %c0_58] : memref<1x4x2x128xf32, #tpu.memory_space<vmem>>, vector<1x1x2x128xf32>
    %84 = vector.shape_cast %83 : vector<1x1x2x128xf32> to vector<2x128xf32>
    %85 = vector.shape_cast %82 : vector<2x128xf32> to vector<1x1x2x128xf32>
    tpu.vector_store %arg7[%c0_55, %c1_56, %c0_57, %c0_58], %85 {strides = array<i32>} : memref<1x4x2x128xf32, #tpu.memory_space<vmem>>, vector<1x1x2x128xf32>,
    %c1_59 = arith.constant 1 : index
    %86 = memref.load %arg6[%c1_59] : memref<4xf32, #tpu.memory_space<smem>>
    %87 = vector.broadcast %86 : f32 to vector<2x128xf32>
    %88 = arith.addf %79, %87 : vector<2x128xf32>
    %c0_60 = arith.constant 0 : index
    %c1_61 = arith.constant 1 : index
    %c0_62 = arith.constant 0 : index
    %c0_63 = arith.constant 0 : index
    %89 = vector.load %arg8[%c0_60, %c1_61, %c0_62, %c0_63] : memref<1x4x2x128xf32, #tpu.memory_space<vmem>>, vector<1x1x2x128xf32>
    %90 = vector.shape_cast %89 : vector<1x1x2x128xf32> to vector<2x128xf32>
    %91 = vector.shape_cast %88 : vector<2x128xf32> to vector<1x1x2x128xf32>
    tpu.vector_store %arg8[%c0_60, %c1_61, %c0_62, %c0_63], %91 {strides = array<i32>} : memref<1x4x2x128xf32, #tpu.memory_space<vmem>>, vector<1x1x2x128xf32>,
    %c0_64 = arith.constant 0 : index
    %c2_65 = arith.constant 2 : index
    %92 = memref.load %arg3[%c0_64, %c2_65] : memref<4x4xf32, #tpu.memory_space<smem>>
    %93 = vector.broadcast %92 : f32 to vector<2x128xf32>
    %94 = arith.mulf %1, %93 : vector<2x128xf32>
    %c0_66 = arith.constant 0 : index
    %c2_67 = arith.constant 2 : index
    %95 = memref.load %arg5[%c0_66, %c2_67] : memref<4x4xf32, #tpu.memory_space<smem>>
    %96 = vector.broadcast %95 : f32 to vector<2x128xf32>
    %97 = arith.mulf %1, %96 : vector<2x128xf32>
    %c1_68 = arith.constant 1 : index
    %c2_69 = arith.constant 2 : index
    %98 = memref.load %arg3[%c1_68, %c2_69] : memref<4x4xf32, #tpu.memory_space<smem>>
    %99 = vector.broadcast %98 : f32 to vector<2x128xf32>
    %100 = arith.mulf %3, %99 : vector<2x128xf32>
    %101 = arith.addf %94, %100 : vector<2x128xf32>
    %c1_70 = arith.constant 1 : index
    %c2_71 = arith.constant 2 : index
    %102 = memref.load %arg5[%c1_70, %c2_71] : memref<4x4xf32, #tpu.memory_space<smem>>
    %103 = vector.broadcast %102 : f32 to vector<2x128xf32>
    %104 = arith.mulf %3, %103 : vector<2x128xf32>
    %105 = arith.addf %97, %104 : vector<2x128xf32>
    %c2_72 = arith.constant 2 : index
    %c2_73 = arith.constant 2 : index
    %106 = memref.load %arg3[%c2_72, %c2_73] : memref<4x4xf32, #tpu.memory_space<smem>>
    %107 = vector.broadcast %106 : f32 to vector<2x128xf32>
    %108 = arith.mulf %5, %107 : vector<2x128xf32>
    %109 = arith.addf %101, %108 : vector<2x128xf32>
    %c2_74 = arith.constant 2 : index
    %c2_75 = arith.constant 2 : index
    %110 = memref.load %arg5[%c2_74, %c2_75] : memref<4x4xf32, #tpu.memory_space<smem>>
    %111 = vector.broadcast %110 : f32 to vector<2x128xf32>
    %112 = arith.mulf %5, %111 : vector<2x128xf32>
    %113 = arith.addf %105, %112 : vector<2x128xf32>
    %c3_76 = arith.constant 3 : index
    %c2_77 = arith.constant 2 : index
    %114 = memref.load %arg3[%c3_76, %c2_77] : memref<4x4xf32, #tpu.memory_space<smem>>
    %115 = vector.broadcast %114 : f32 to vector<2x128xf32>
    %116 = arith.mulf %7, %115 : vector<2x128xf32>
    %117 = arith.addf %109, %116 : vector<2x128xf32>
    %c3_78 = arith.constant 3 : index
    %c2_79 = arith.constant 2 : index
    %118 = memref.load %arg5[%c3_78, %c2_79] : memref<4x4xf32, #tpu.memory_space<smem>>
    %119 = vector.broadcast %118 : f32 to vector<2x128xf32>
    %120 = arith.mulf %7, %119 : vector<2x128xf32>
    %121 = arith.addf %113, %120 : vector<2x128xf32>
    %c2_80 = arith.constant 2 : index
    %122 = memref.load %arg4[%c2_80] : memref<4xf32, #tpu.memory_space<smem>>
    %123 = vector.broadcast %122 : f32 to vector<2x128xf32>
    %124 = arith.addf %117, %123 : vector<2x128xf32>
    %c0_81 = arith.constant 0 : index
    %c2_82 = arith.constant 2 : index
    %c0_83 = arith.constant 0 : index
    %c0_84 = arith.constant 0 : index
    %125 = vector.load %arg7[%c0_81, %c2_82, %c0_83, %c0_84] : memref<1x4x2x128xf32, #tpu.memory_space<vmem>>, vector<1x1x2x128xf32>
    %126 = vector.shape_cast %125 : vector<1x1x2x128xf32> to vector<2x128xf32>
    %127 = vector.shape_cast %124 : vector<2x128xf32> to vector<1x1x2x128xf32>
    tpu.vector_store %arg7[%c0_81, %c2_82, %c0_83, %c0_84], %127 {strides = array<i32>} : memref<1x4x2x128xf32, #tpu.memory_space<vmem>>, vector<1x1x2x128xf32>,
    %c2_85 = arith.constant 2 : index
    %128 = memref.load %arg6[%c2_85] : memref<4xf32, #tpu.memory_space<smem>>
    %129 = vector.broadcast %128 : f32 to vector<2x128xf32>
    %130 = arith.addf %121, %129 : vector<2x128xf32>
    %c0_86 = arith.constant 0 : index
    %c2_87 = arith.constant 2 : index
    %c0_88 = arith.constant 0 : index
    %c0_89 = arith.constant 0 : index
    %131 = vector.load %arg8[%c0_86, %c2_87, %c0_88, %c0_89] : memref<1x4x2x128xf32, #tpu.memory_space<vmem>>, vector<1x1x2x128xf32>
    %132 = vector.shape_cast %131 : vector<1x1x2x128xf32> to vector<2x128xf32>
    %133 = vector.shape_cast %130 : vector<2x128xf32> to vector<1x1x2x128xf32>
    tpu.vector_store %arg8[%c0_86, %c2_87, %c0_88, %c0_89], %133 {strides = array<i32>} : memref<1x4x2x128xf32, #tpu.memory_space<vmem>>, vector<1x1x2x128xf32>,
    %c0_90 = arith.constant 0 : index
    %c3_91 = arith.constant 3 : index
    %134 = memref.load %arg3[%c0_90, %c3_91] : memref<4x4xf32, #tpu.memory_space<smem>>
    %135 = vector.broadcast %134 : f32 to vector<2x128xf32>
    %136 = arith.mulf %1, %135 : vector<2x128xf32>
    %c0_92 = arith.constant 0 : index
    %c3_93 = arith.constant 3 : index
    %137 = memref.load %arg5[%c0_92, %c3_93] : memref<4x4xf32, #tpu.memory_space<smem>>
    %138 = vector.broadcast %137 : f32 to vector<2x128xf32>
    %139 = arith.mulf %1, %138 : vector<2x128xf32>
    %c1_94 = arith.constant 1 : index
    %c3_95 = arith.constant 3 : index
    %140 = memref.load %arg3[%c1_94, %c3_95] : memref<4x4xf32, #tpu.memory_space<smem>>
    %141 = vector.broadcast %140 : f32 to vector<2x128xf32>
    %142 = arith.mulf %3, %141 : vector<2x128xf32>
    %143 = arith.addf %136, %142 : vector<2x128xf32>
    %c1_96 = arith.constant 1 : index
    %c3_97 = arith.constant 3 : index
    %144 = memref.load %arg5[%c1_96, %c3_97] : memref<4x4xf32, #tpu.memory_space<smem>>
    %145 = vector.broadcast %144 : f32 to vector<2x128xf32>
    %146 = arith.mulf %3, %145 : vector<2x128xf32>
    %147 = arith.addf %139, %146 : vector<2x128xf32>
    %c2_98 = arith.constant 2 : index
    %c3_99 = arith.constant 3 : index
    %148 = memref.load %arg3[%c2_98, %c3_99] : memref<4x4xf32, #tpu.memory_space<smem>>
    %149 = vector.broadcast %148 : f32 to vector<2x128xf32>
    %150 = arith.mulf %5, %149 : vector<2x128xf32>
    %151 = arith.addf %143, %150 : vector<2x128xf32>
    %c2_100 = arith.constant 2 : index
    %c3_101 = arith.constant 3 : index
    %152 = memref.load %arg5[%c2_100, %c3_101] : memref<4x4xf32, #tpu.memory_space<smem>>
    %153 = vector.broadcast %152 : f32 to vector<2x128xf32>
    %154 = arith.mulf %5, %153 : vector<2x128xf32>
    %155 = arith.addf %147, %154 : vector<2x128xf32>
    %c3_102 = arith.constant 3 : index
    %c3_103 = arith.constant 3 : index
    %156 = memref.load %arg3[%c3_102, %c3_103] : memref<4x4xf32, #tpu.memory_space<smem>>
    %157 = vector.broadcast %156 : f32 to vector<2x128xf32>
    %158 = arith.mulf %7, %157 : vector<2x128xf32>
    %159 = arith.addf %151, %158 : vector<2x128xf32>
    %c3_104 = arith.constant 3 : index
    %c3_105 = arith.constant 3 : index
    %160 = memref.load %arg5[%c3_104, %c3_105] : memref<4x4xf32, #tpu.memory_space<smem>>
    %161 = vector.broadcast %160 : f32 to vector<2x128xf32>
    %162 = arith.mulf %7, %161 : vector<2x128xf32>
    %163 = arith.addf %155, %162 : vector<2x128xf32>
    %c3_106 = arith.constant 3 : index
    %164 = memref.load %arg4[%c3_106] : memref<4xf32, #tpu.memory_space<smem>>
    %165 = vector.broadcast %164 : f32 to vector<2x128xf32>
    %166 = arith.addf %159, %165 : vector<2x128xf32>
    %c0_107 = arith.constant 0 : index
    %c3_108 = arith.constant 3 : index
    %c0_109 = arith.constant 0 : index
    %c0_110 = arith.constant 0 : index
    %167 = vector.load %arg7[%c0_107, %c3_108, %c0_109, %c0_110] : memref<1x4x2x128xf32, #tpu.memory_space<vmem>>, vector<1x1x2x128xf32>
    %168 = vector.shape_cast %167 : vector<1x1x2x128xf32> to vector<2x128xf32>
    %169 = vector.shape_cast %166 : vector<2x128xf32> to vector<1x1x2x128xf32>
    tpu.vector_store %arg7[%c0_107, %c3_108, %c0_109, %c0_110], %169 {strides = array<i32>} : memref<1x4x2x128xf32, #tpu.memory_space<vmem>>, vector<1x1x2x128xf32>,
    %c3_111 = arith.constant 3 : index
    %170 = memref.load %arg6[%c3_111] : memref<4xf32, #tpu.memory_space<smem>>
    %171 = vector.broadcast %170 : f32 to vector<2x128xf32>
    %172 = arith.addf %163, %171 : vector<2x128xf32>
    %c0_112 = arith.constant 0 : index
    %c3_113 = arith.constant 3 : index
    %c0_114 = arith.constant 0 : index
    %c0_115 = arith.constant 0 : index
    %173 = vector.load %arg8[%c0_112, %c3_113, %c0_114, %c0_115] : memref<1x4x2x128xf32, #tpu.memory_space<vmem>>, vector<1x1x2x128xf32>
    %174 = vector.shape_cast %173 : vector<1x1x2x128xf32> to vector<2x128xf32>
    %175 = vector.shape_cast %172 : vector<2x128xf32> to vector<1x1x2x128xf32>
    tpu.vector_store %arg8[%c0_112, %c3_113, %c0_114, %c0_115], %175 {strides = array<i32>} : memref<1x4x2x128xf32, #tpu.memory_space<vmem>>, vector<1x1x2x128xf32>,
    return
  }
  func.func @transform_0(%arg0: i32, %arg1: i32) -> (i32, i32, i32, i32) {
    %c0_i32 = arith.constant 0 : i32
    %c0_i32_0 = arith.constant 0 : i32
    %c0_i32_1 = arith.constant 0 : i32
    return %arg0, %c0_i32, %arg1, %c0_i32_0 : i32, i32, i32, i32
  }
  func.func @transform_1(%arg0: i32, %arg1: i32) -> (i32, i32) {
    %c0_i32 = arith.constant 0 : i32
    %c0_i32_0 = arith.constant 0 : i32
    %c0_i32_1 = arith.constant 0 : i32
    return %c0_i32, %c0_i32_0 : i32, i32
  }
  func.func @transform_2(%arg0: i32, %arg1: i32) -> i32 {
    %c0_i32 = arith.constant 0 : i32
    %c0_i32_0 = arith.constant 0 : i32
    return %c0_i32 : i32
  }
  func.func @transform_3(%arg0: i32, %arg1: i32) -> (i32, i32) {
    %c0_i32 = arith.constant 0 : i32
    %c0_i32_0 = arith.constant 0 : i32
    %c0_i32_1 = arith.constant 0 : i32
    return %c0_i32, %c0_i32_0 : i32, i32
  }
  func.func @transform_4(%arg0: i32, %arg1: i32) -> i32 {
    %c0_i32 = arith.constant 0 : i32
    %c0_i32_0 = arith.constant 0 : i32
    return %c0_i32 : i32
  }
  func.func @transform_5(%arg0: i32, %arg1: i32) -> (i32, i32, i32, i32) {
    %c0_i32 = arith.constant 0 : i32
    %c0_i32_0 = arith.constant 0 : i32
    %c0_i32_1 = arith.constant 0 : i32
    return %arg0, %c0_i32, %arg1, %c0_i32_0 : i32, i32, i32, i32
  }
  func.func @transform_6(%arg0: i32, %arg1: i32) -> (i32, i32, i32, i32) {
    %c0_i32 = arith.constant 0 : i32
    %c0_i32_0 = arith.constant 0 : i32
    %c0_i32_1 = arith.constant 0 : i32
    return %arg0, %c0_i32, %arg1, %c0_i32_0 : i32, i32, i32, i32
  }
}

</mosaic_0001>

<llo_original>
// kernel: abcd_forward.1
$region0: #{abcd_forward.1}
  #allocation0 [shape = 'u32[]', space=smem, size = 0x4, offset = 0x4, fixed_abs, tag = 'smem constant byte address 0x4 - core index']
  #allocation1 [shape = 'u32[144,128]{1,0:T(1,128)}', space=vmem, size = 0x12000, scoped, tag = 'internal scratch']
  %s0 = inlined_call_operand.vmem [shape: f32[2,4,2,128], index: 0, kind: input, shape index: {}]
  %s1 = inlined_call_operand.vmem [shape: f32[4,4], index: 1, kind: input, shape index: {}]
  %s2 = inlined_call_operand.vmem [shape: f32[4], index: 2, kind: input, shape index: {}]
  %s3 = inlined_call_operand.vmem [shape: f32[4,4], index: 3, kind: input, shape index: {}]
  %s4 = inlined_call_operand.vmem [shape: f32[4], index: 4, kind: input, shape index: {}]
  %s5 = inlined_call_operand.vmem [shape: f32[2,4,2,128], index: 5, kind: output, shape index: {0}]
  %s6 = inlined_call_operand.vmem [shape: f32[2,4,2,128], index: 6, kind: output, shape index: {1}]
  %7 = xla_tuple %s5, %s6
  %s8 = sld [smem:[#allocation0]]
  $region77: #{abcd_forward.1} parent=0
    _
  %s10 = ssub.s32 1, %s8
  %s11 = scalar_select 0, %s10, %s8
  $region1: #{abcd_forward.1} parent=0
    #allocation2 [shape = 'u8[2048]{0}', space=smem, size = 0x800, scoped, tag = 'input window, operand 1, single buffered']
    #allocation3 [shape = 's32[2]{0}', space=sflag, size = 0x8, scoped, tag = 'scoped memory for abcd_forward.1']
    #allocation4 [shape = 'u8[512]{0}', space=smem, size = 0x200, scoped, tag = 'input window, operand 2, single buffered']
    #allocation5 [shape = 's32[1]{0}', space=sflag, size = 0x4, scoped, tag = 'scoped memory for abcd_forward.1']
    #allocation6 [shape = 'u8[2048]{0}', space=smem, size = 0x800, scoped, tag = 'input window, operand 3, single buffered']
    #allocation7 [shape = 'u8[512]{0}', space=smem, size = 0x200, scoped, tag = 'input window, operand 4, single buffered']
    #allocation8 [shape = 's32[1]{0}', space=sflag, size = 0x4, scoped, tag = 'scoped memory for abcd_forward.1']
    %12 = vsyncpa [#allocation3], 0
    %13 = vsyncpa [#allocation5], 0
    %14 = vsyncpa [#allocation8], 0
    loop: start=0, step=1, limit=4
    $region2: #{abcd_forward.1} parent=1 // loop_pre_header
      _
    $region3: #{abcd_forward.1} parent=1 // loop_header
      %s16 = sphi 0, %s20
      %p17 = scmp.ge.s32.totalorder %s16, 4
      %s23 = sphi 0, %s35
      %s24 = sphi 0, %s31
      %s25 = sphi 0, %s23
      %s26 = sphi 0, %s24
      %s27 = sphi 0, %s25
      %s28 = sphi 0, %s26
      %s40 = sphi 0, %s42
      %s43 = sphi 0, %s40
      %s44 = sphi 0, %s43
      %s60 = sphi 0, %s44
      %s64 = sphi 0, %s64
      %s66 = sphi 0, %s64
      %s67 = sphi 0, %s66
      %s81 = sphi 0, %s67
      %s85 = sphi 0, %s85
      %s87 = sphi 0, %s85
      %s88 = sphi 0, %s87
      %s102 = sphi 0, %s88
      %s106 = sphi 0, %s106
      %s108 = sphi 0, %s106
      %s109 = sphi 0, %s108
      %s123 = sphi 0, %s109
      %s127 = sphi 0, %s127
      %s129 = sphi 0, %s127
      %s130 = sphi 0, %s129
      %s144 = sphi 0, %s130
      %s152 = sphi 0, %s154
      %s155 = sphi 0, %s152
      %s156 = sphi 0, %s155
      %s172 = sphi 0, %s156
      %s180 = sphi 0, %s182
      %s183 = sphi 0, %s180
      %s184 = sphi 0, %s183
      %s200 = sphi 0, %s184
    $region4: #{abcd_forward.1} parent=1 // loop_header_branch
      %19 = sbr.rel (%p17) target = $region8
    $region5: #{abcd_forward.1} parent=1 // loop_body
      %s21 = ssub.s32 %s16, 1
      %s22 = ssub.s32 %s16, 2
      %s29 = sadd.s32 1, %s24
      %p30 = scmp.ge.s32.totalorder %s29, 1
      %s31 = scalar_select %p30, 0, %s29
      %s32 = sadd.s32 1, %s23
      %s33 = scalar_select %p30, %s32, %s23
      %p34 = scmp.ge.s32.totalorder %s33, 2
      %s35 = scalar_select %p34, 0, %s33
      %s36 = ssub.s32 %s23, %s35
      %s37 = ssub.s32 %s24, %s31
      %s38 = sor.u32 %s36, %s37
      %p39 = scmp.eq.s32.totalorder %s38, 0
      %s41 = sadd.s32 %s40, 1
      %s42 = scalar_select %p39, %s40, %s41
      %p45 = pneg %p39
      %p46 = scmp.eq.s32.totalorder %s16, 1
      %p47 = por %p45, %p46
      %p48 = scmp.ne.s32.totalorder %s40, %s43
      %p49 = scmp.eq.s32.totalorder %s16, 0
      %p50 = por %p48, %p49
      %p51 = scmp.ne.s32.totalorder %s40, %s43
      %p52 = scmp.eq.s32.totalorder %s21, 1
      %p53 = por %p51, %p52
      %p54 = scmp.ne.s32.totalorder %s43, %s44
      %p55 = scmp.eq.s32.totalorder %s21, 0
      %p56 = por %p54, %p55
      %p57 = scmp.ne.s32.totalorder %s43, %s44
      %p58 = scmp.eq.s32.totalorder %s22, 1
      %p59 = por %p57, %p58
      %p61 = scmp.ne.s32.totalorder %s44, %s60
      %p62 = scmp.eq.s32.totalorder %s22, 0
      %p63 = por %p61, %p62
      %s65 = sadd.s32 %s64, 1
      %p68 = scmp.eq.s32.totalorder %s16, 1
      %p69 = scmp.ne.s32.totalorder %s64, %s66
      %p70 = scmp.eq.s32.totalorder %s16, 0
      %p71 = por %p69, %p70
      %p72 = scmp.ne.s32.totalorder %s64, %s66
      %p73 = scmp.eq.s32.totalorder %s21, 1
      %p74 = por %p72, %p73
      %p75 = scmp.ne.s32.totalorder %s66, %s67
      %p76 = scmp.eq.s32.totalorder %s21, 0
      %p77 = por %p75, %p76
      %p78 = scmp.ne.s32.totalorder %s66, %s67
      %p79 = scmp.eq.s32.totalorder %s22, 1
      %p80 = por %p78, %p79
      %p82 = scmp.ne.s32.totalorder %s67, %s81
      %p83 = scmp.eq.s32.totalorder %s22, 0
      %p84 = por %p82, %p83
      %s86 = sadd.s32 %s85, 1
      %p89 = scmp.eq.s32.totalorder %s16, 1
      %p90 = scmp.ne.s32.totalorder %s85, %s87
      %p91 = scmp.eq.s32.totalorder %s16, 0
      %p92 = por %p90, %p91
      %p93 = scmp.ne.s32.totalorder %s85, %s87
      %p94 = scmp.eq.s32.totalorder %s21, 1
      %p95 = por %p93, %p94
      %p96 = scmp.ne.s32.totalorder %s87, %s88
      %p97 = scmp.eq.s32.totalorder %s21, 0
      %p98 = por %p96, %p97
      %p99 = scmp.ne.s32.totalorder %s87, %s88
      %p100 = scmp.eq.s32.totalorder %s22, 1
      %p101 = por %p99, %p100
      %p103 = scmp.ne.s32.totalorder %s88, %s102
      %p104 = scmp.eq.s32.totalorder %s22, 0
      %p105 = por %p103, %p104
      %s107 = sadd.s32 %s106, 1
      %p110 = scmp.eq.s32.totalorder %s16, 1
      %p111 = scmp.ne.s32.totalorder %s106, %s108
      %p112 = scmp.eq.s32.totalorder %s16, 0
      %p113 = por %p111, %p112
      %p114 = scmp.ne.s32.totalorder %s106, %s108
      %p115 = scmp.eq.s32.totalorder %s21, 1
      %p116 = por %p114, %p115
      %p117 = scmp.ne.s32.totalorder %s108, %s109
      %p118 = scmp.eq.s32.totalorder %s21, 0
      %p119 = por %p117, %p118
      %p120 = scmp.ne.s32.totalorder %s108, %s109
      %p121 = scmp.eq.s32.totalorder %s22, 1
      %p122 = por %p120, %p121
      %p124 = scmp.ne.s32.totalorder %s109, %s123
      %p125 = scmp.eq.s32.totalorder %s22, 0
      %p126 = por %p124, %p125
      %s128 = sadd.s32 %s127, 1
      %p131 = scmp.eq.s32.totalorder %s16, 1
      %p132 = scmp.ne.s32.totalorder %s127, %s129
      %p133 = scmp.eq.s32.totalorder %s16, 0
      %p134 = por %p132, %p133
      %p135 = scmp.ne.s32.totalorder %s127, %s129
      %p136 = scmp.eq.s32.totalorder %s21, 1
      %p137 = por %p135, %p136
      %p138 = scmp.ne.s32.totalorder %s129, %s130
      %p139 = scmp.eq.s32.totalorder %s21, 0
      %p140 = por %p138, %p139
      %p141 = scmp.ne.s32.totalorder %s129, %s130
      %p142 = scmp.eq.s32.totalorder %s22, 1
      %p143 = por %p141, %p142
      %p145 = scmp.ne.s32.totalorder %s130, %s144
      %p146 = scmp.eq.s32.totalorder %s22, 0
      %p147 = por %p145, %p146
      %s148 = ssub.s32 %s23, %s35
      %s149 = ssub.s32 %s24, %s31
      %s150 = sor.u32 %s148, %s149
      %p151 = scmp.eq.s32.totalorder %s150, 0
      %s153 = sadd.s32 %s152, 1
      %s154 = scalar_select %p151, %s152, %s153
      %p157 = pneg %p151
      %p158 = scmp.eq.s32.totalorder %s16, 1
      %p159 = por %p157, %p158
      %p160 = scmp.ne.s32.totalorder %s152, %s155
      %p161 = scmp.eq.s32.totalorder %s16, 0
      %p162 = por %p160, %p161
      %p163 = scmp.ne.s32.totalorder %s152, %s155
      %p164 = scmp.eq.s32.totalorder %s21, 1
      %p165 = por %p163, %p164
      %p166 = scmp.ne.s32.totalorder %s155, %s156
      %p167 = scmp.eq.s32.totalorder %s21, 0
      %p168 = por %p166, %p167
      %p169 = scmp.ne.s32.totalorder %s155, %s156
      %p170 = scmp.eq.s32.totalorder %s22, 1
      %p171 = por %p169, %p170
      %p173 = scmp.ne.s32.totalorder %s156, %s172
      %p174 = scmp.eq.s32.totalorder %s22, 0
      %p175 = por %p173, %p174
      %s176 = ssub.s32 %s23, %s35
      %s177 = ssub.s32 %s24, %s31
      %s178 = sor.u32 %s176, %s177
      %p179 = scmp.eq.s32.totalorder %s178, 0
      %s181 = sadd.s32 %s180, 1
      %s182 = scalar_select %p179, %s180, %s181
      %p185 = pneg %p179
      %p186 = scmp.eq.s32.totalorder %s16, 1
      %p187 = por %p185, %p186
      %p188 = scmp.ne.s32.totalorder %s180, %s183
      %p189 = scmp.eq.s32.totalorder %s16, 0
      %p190 = por %p188, %p189
      %p191 = scmp.ne.s32.totalorder %s180, %s183
      %p192 = scmp.eq.s32.totalorder %s21, 1
      %p193 = por %p191, %p192
      %p194 = scmp.ne.s32.totalorder %s183, %s184
      %p195 = scmp.eq.s32.totalorder %s21, 0
      %p196 = por %p194, %p195
      %p197 = scmp.ne.s32.totalorder %s183, %s184
      %p198 = scmp.eq.s32.totalorder %s22, 1
      %p199 = por %p197, %p198
      %p201 = scmp.ne.s32.totalorder %s184, %s200
      %p202 = scmp.eq.s32.totalorder %s22, 0
      %p203 = por %p201, %p202
      %p204 = scmp.le.s32.totalorder 1, %s16
      %p205 = scmp.lt.s32.totalorder %s16, 3
      %p206 = pnand %p204, %p205
      %p207 = pneg %p206
      // Predicated region
      $region9: #{abcd_forward.1} parent=5 // pred_check
        _
      $region10: #{abcd_forward.1} parent=5 // pred_check_branch
        %209 = sbr.rel (%p206) target = $region12
      $region11: #{abcd_forward.1} parent=5 // pred_region
        %s210 = ssub.s32 %s16, 1
        // Predicated region
        $region13: #{abcd_forward.1} parent=11 // pred_check
          %p211 = pneg %p77
        $region14: #{abcd_forward.1} parent=11 // pred_check_branch
          %213 = sbr.rel (%p211) target = $region16
        $region15: #{abcd_forward.1} parent=11 // pred_region
          %s215 = ssub.s32 64, 64
          %216 = vsyncadd [#allocation3], %s215
          %s218 = sshll.u32 %s1, 4
          %s219 = int_to_ptr.vmem [resolvable:$true] %s218
          %221 = dma.vmem_to_smem %s219, 64, [#allocation2], [#allocation3]
        $region16: #{abcd_forward.1} parent=11 // pred_fallthru
          _
        // Predicated region
        $region17: #{abcd_forward.1} parent=11 // pred_check
          %p222 = pneg %p98
        $region18: #{abcd_forward.1} parent=11 // pred_check_branch
          %224 = sbr.rel (%p222) target = $region20
        $region19: #{abcd_forward.1} parent=11 // pred_region
          %s226 = ssub.s32 16, 16
          %227 = vsyncadd [#allocation5], %s226
          %s229 = sshll.u32 %s2, 4
          %s230 = int_to_ptr.vmem [resolvable:$true] %s229
          %232 = dma.vmem_to_smem %s230, 16, [#allocation4], [#allocation5]
        $region20: #{abcd_forward.1} parent=11 // pred_fallthru
          _
        // Predicated region
        $region21: #{abcd_forward.1} parent=11 // pred_check
          %p233 = pneg %p119
        $region22: #{abcd_forward.1} parent=11 // pred_check_branch
          %235 = sbr.rel (%p233) target = $region24
        $region23: #{abcd_forward.1} parent=11 // pred_region
          %s237 = ssub.s32 64, 64
          %238 = vsyncadd [#allocation5], %s237
          %s240 = sshll.u32 %s3, 4
          %s241 = int_to_ptr.vmem [resolvable:$true] %s240
          %243 = dma.vmem_to_smem %s241, 64, [#allocation6], [#allocation5]
        $region24: #{abcd_forward.1} parent=11 // pred_fallthru
          _
        // Predicated region
        $region25: #{abcd_forward.1} parent=11 // pred_check
          %p244 = pneg %p140
        $region26: #{abcd_forward.1} parent=11 // pred_check_branch
          %246 = sbr.rel (%p244) target = $region28
        $region27: #{abcd_forward.1} parent=11 // pred_region
          %s248 = ssub.s32 16, 16
          %249 = vsyncadd [#allocation8], %s248
          %s251 = sshll.u32 %s4, 4
          %s252 = int_to_ptr.vmem [resolvable:$true] %s251
          %254 = dma.vmem_to_smem %s252, 16, [#allocation7], [#allocation8]
        $region28: #{abcd_forward.1} parent=11 // pred_fallthru
          _
      $region12: #{abcd_forward.1} parent=5 // pred_fallthru
        _
      %p255 = scmp.lt.s32.totalorder %s16, 2
      // Predicated region
      $region29: #{abcd_forward.1} parent=5 // pred_check
        %p256 = pneg %p255
      $region30: #{abcd_forward.1} parent=5 // pred_check_branch
        %258 = sbr.rel (%p256) target = $region32
      $region31: #{abcd_forward.1} parent=5 // pred_region
        // Predicated region
        $region33: #{abcd_forward.1} parent=31 // pred_check
          %p259 = pneg %p50
        $region34: #{abcd_forward.1} parent=31 // pred_check_branch
          %261 = sbr.rel (%p259) target = $region36
        $region35: #{abcd_forward.1} parent=31 // pred_region
          %p262 = scmp.lt.s32.totalorder %s23, 1
          %s263 = scalar_select %p262, %s23, 1
          %p264 = scmp.lt.s32.totalorder %s24, 0
          %s265 = scalar_select %p264, %s24, 0
          %s266 = smul.addr %s263, 4
          %s267 = sadd.s32 %s265, %s266
          %s268 = smul.addr %s267, 2
          %s269 = scalar_lea.vmem %s0, %s268
        $region36: #{abcd_forward.1} parent=31 // pred_fallthru
          _
      $region32: #{abcd_forward.1} parent=5 // pred_fallthru
        _
      %p270 = scmp.le.s32.totalorder 1, %s16
      %p271 = scmp.lt.s32.totalorder %s16, 3
      %p272 = pnand %p270, %p271
      %p273 = pneg %p272
      // Predicated region
      $region37: #{abcd_forward.1} parent=5 // pred_check
        _
      $region38: #{abcd_forward.1} parent=5 // pred_check_branch
        %275 = sbr.rel (%p272) target = $region40
      $region39: #{abcd_forward.1} parent=5 // pred_region
        %s276 = ssub.s32 %s16, 1
        // Predicated region
        $region41: #{abcd_forward.1} parent=39 // pred_check
          %p277 = pneg %p77
        $region42: #{abcd_forward.1} parent=39 // pred_check_branch
          %279 = sbr.rel (%p277) target = $region44
        $region43: #{abcd_forward.1} parent=39 // pred_region
          %280 = dma.done [#allocation3], 64
        $region44: #{abcd_forward.1} parent=39 // pred_fallthru
          _
        // Predicated region
        $region45: #{abcd_forward.1} parent=39 // pred_check
          %p281 = pneg %p98
        $region46: #{abcd_forward.1} parent=39 // pred_check_branch
          %283 = sbr.rel (%p281) target = $region48
        $region47: #{abcd_forward.1} parent=39 // pred_region
          %284 = dma.done [#allocation5], 16
        $region48: #{abcd_forward.1} parent=39 // pred_fallthru
          _
        // Predicated region
        $region49: #{abcd_forward.1} parent=39 // pred_check
          %p285 = pneg %p119
        $region50: #{abcd_forward.1} parent=39 // pred_check_branch
          %287 = sbr.rel (%p285) target = $region52
        $region51: #{abcd_forward.1} parent=39 // pred_region
          %288 = dma.done [#allocation5], 64
        $region52: #{abcd_forward.1} parent=39 // pred_fallthru
          _
        // Predicated region
        $region53: #{abcd_forward.1} parent=39 // pred_check
          %p289 = pneg %p140
        $region54: #{abcd_forward.1} parent=39 // pred_check_branch
          %291 = sbr.rel (%p289) target = $region56
        $region55: #{abcd_forward.1} parent=39 // pred_region
          %292 = dma.done [#allocation8], 16
        $region56: #{abcd_forward.1} parent=39 // pred_fallthru
          _
        %293 = sfence
        %p294 = scmp.lt.s32.totalorder %s25, 1
        %s295 = scalar_select %p294, %s25, 1
        %p296 = scmp.lt.s32.totalorder %s26, 0
        %s297 = scalar_select %p296, %s26, 0
        %s298 = smul.addr %s295, 4
        %s299 = sadd.s32 %s297, %s298
        %s300 = smul.addr %s299, 2
        %s301 = scalar_lea.vmem %s0, %s300
        %p302 = pneg %p56
        %p303 = pneg %p53
        %p304 = pneg %p77
        %p305 = pneg %p74
        %p306 = pneg %p98
        %p307 = pneg %p95
        %p308 = pneg %p119
        %p309 = pneg %p116
        %p310 = pneg %p140
        %p311 = pneg %p137
        %p312 = pneg %p168
        %p313 = pneg %p165
        %p314 = scmp.lt.s32.totalorder %s25, 1
        %s315 = scalar_select %p314, %s25, 1
        %p316 = scmp.lt.s32.totalorder %s26, 0
        %s317 = scalar_select %p316, %s26, 0
        %s318 = smul.addr %s315, 4
        %s319 = sadd.s32 %s317, %s318
        %s320 = smul.addr %s319, 2
        %s321 = scalar_lea.vmem %s5, %s320
        %p322 = pneg %p196
        %p323 = pneg %p193
        %p324 = scmp.lt.s32.totalorder %s25, 1
        %s325 = scalar_select %p324, %s25, 1
        %p326 = scmp.lt.s32.totalorder %s26, 0
        %s327 = scalar_select %p326, %s26, 0
        %s328 = smul.addr %s325, 4
        %s329 = sadd.s32 %s327, %s328
        %s330 = smul.addr %s329, 2
        %s331 = scalar_lea.vmem %s6, %s330
        %p332 = scmp.lt.s32.totalorder %s25, 1
        %s333 = scalar_select %p332, %s25, 1
        %p334 = scmp.lt.s32.totalorder %s26, 0
        %s335 = scalar_select %p334, %s26, 0
        %s336 = smul.addr %s333, 4
        %s337 = sadd.s32 %s335, %s336
        %s338 = smul.addr %s337, 2
        %s339 = scalar_lea.vmem %s0, %s338
        %p340 = scmp.lt.s32.totalorder %s25, 1
        %s341 = scalar_select %p340, %s25, 1
        %p342 = scmp.lt.s32.totalorder %s26, 0
        %s343 = scalar_select %p342, %s26, 0
        %s344 = smul.addr %s341, 4
        %s345 = sadd.s32 %s343, %s344
        %s346 = smul.addr %s345, 2
        %s347 = scalar_lea.vmem %s5, %s346
        %p348 = scmp.lt.s32.totalorder %s25, 1
        %s349 = scalar_select %p348, %s25, 1
        %p350 = scmp.lt.s32.totalorder %s26, 0
        %s351 = scalar_select %p350, %s26, 0
        %s352 = smul.addr %s349, 4
        %s353 = sadd.s32 %s351, %s352
        %s354 = smul.addr %s353, 2
        %s355 = scalar_lea.vmem %s6, %s354
        %v356 = vld [vmem:[%s339] sm:$0x3]
        %s357 = scalar_lea.vmem %s339, 2
        %v358 = vld [vmem:[%s357] sm:$0x3]
        %s359 = scalar_lea.vmem %s339, 4
        %v360 = vld [vmem:[%s359] sm:$0x3]
        %s361 = scalar_lea.vmem %s339, 6
        %v362 = vld [vmem:[%s361] sm:$0x3]
        %s363 = sld [smem:[#allocation2]]
        %v364 = vstv %s363
        %v365 = vmul.f32 %v356, %v364
        %s366 = sld [smem:[#allocation6]]
        %v367 = vstv %s366
        %v368 = vmul.f32 %v356, %v367
        %s369 = sld [smem:[#allocation2 + $0x80]]
        %v370 = vstv %s369
        %v371 = vmul.f32 %v358, %v370
        %v372 = vadd.f32 %v365, %v371
        %s373 = sld [smem:[#allocation6 + $0x80]]
        %v374 = vstv %s373
        %v375 = vmul.f32 %v358, %v374
        %v376 = vadd.f32 %v368, %v375
        %s377 = sld [smem:[#allocation2 + $0x100]]
        %v378 = vstv %s377
        %v379 = vmul.f32 %v360, %v378
        %v380 = vadd.f32 %v372, %v379
        %s381 = sld [smem:[#allocation6 + $0x100]]
        %v382 = vstv %s381
        %v383 = vmul.f32 %v360, %v382
        %v384 = vadd.f32 %v376, %v383
        %s385 = sld [smem:[#allocation2 + $0x180]]
        %v386 = vstv %s385
        %v387 = vmul.f32 %v362, %v386
        %v388 = vadd.f32 %v380, %v387
        %s389 = sld [smem:[#allocation6 + $0x180]]
        %v390 = vstv %s389
        %v391 = vmul.f32 %v362, %v390
        %v392 = vadd.f32 %v384, %v391
        %s393 = sld [smem:[#allocation4]]
        %v394 = vstv %s393
        %v395 = vadd.f32 %v388, %v394
        %396 = vst [vmem:[%s347] sm:$0x3] %v395
        %s397 = sld [smem:[#allocation7]]
        %v398 = vstv %s397
        %v399 = vadd.f32 %v392, %v398
        %400 = vst [vmem:[%s355] sm:$0x3] %v399
        %s401 = sld [smem:[#allocation2 + $0x1]]
        %v402 = vstv %s401
        %v403 = vmul.f32 %v356, %v402
        %s404 = sld [smem:[#allocation6 + $0x1]]
        %v405 = vstv %s404
        %v406 = vmul.f32 %v356, %v405
        %s407 = sld [smem:[#allocation2 + $0x81]]
        %v408 = vstv %s407
        %v409 = vmul.f32 %v358, %v408
        %v410 = vadd.f32 %v403, %v409
        %s411 = sld [smem:[#allocation6 + $0x81]]
        %v412 = vstv %s411
        %v413 = vmul.f32 %v358, %v412
        %v414 = vadd.f32 %v406, %v413
        %s415 = sld [smem:[#allocation2 + $0x101]]
        %v416 = vstv %s415
        %v417 = vmul.f32 %v360, %v416
        %v418 = vadd.f32 %v410, %v417
        %s419 = sld [smem:[#allocation6 + $0x101]]
        %v420 = vstv %s419
        %v421 = vmul.f32 %v360, %v420
        %v422 = vadd.f32 %v414, %v421
        %s423 = sld [smem:[#allocation2 + $0x181]]
        %v424 = vstv %s423
        %v425 = vmul.f32 %v362, %v424
        %v426 = vadd.f32 %v418, %v425
        %s427 = sld [smem:[#allocation6 + $0x181]]
        %v428 = vstv %s427
        %v429 = vmul.f32 %v362, %v428
        %v430 = vadd.f32 %v422, %v429
        %s431 = sld [smem:[#allocation4 + $0x1]]
        %v432 = vstv %s431
        %v433 = vadd.f32 %v426, %v432
        %s434 = scalar_lea.vmem %s347, 2
        %435 = vst [vmem:[%s434] sm:$0x3] %v433
        %s436 = sld [smem:[#allocation7 + $0x1]]
        %v437 = vstv %s436
        %v438 = vadd.f32 %v430, %v437
        %s439 = scalar_lea.vmem %s355, 2
        %440 = vst [vmem:[%s439] sm:$0x3] %v438
        %s441 = sld [smem:[#allocation2 + $0x2]]
        %v442 = vstv %s441
        %v443 = vmul.f32 %v356, %v442
        %s444 = sld [smem:[#allocation6 + $0x2]]
        %v445 = vstv %s444
        %v446 = vmul.f32 %v356, %v445
        %s447 = sld [smem:[#allocation2 + $0x82]]
        %v448 = vstv %s447
        %v449 = vmul.f32 %v358, %v448
        %v450 = vadd.f32 %v443, %v449
        %s451 = sld [smem:[#allocation6 + $0x82]]
        %v452 = vstv %s451
        %v453 = vmul.f32 %v358, %v452
        %v454 = vadd.f32 %v446, %v453
        %s455 = sld [smem:[#allocation2 + $0x102]]
        %v456 = vstv %s455
        %v457 = vmul.f32 %v360, %v456
        %v458 = vadd.f32 %v450, %v457
        %s459 = sld [smem:[#allocation6 + $0x102]]
        %v460 = vstv %s459
        %v461 = vmul.f32 %v360, %v460
        %v462 = vadd.f32 %v454, %v461
        %s463 = sld [smem:[#allocation2 + $0x182]]
        %v464 = vstv %s463
        %v465 = vmul.f32 %v362, %v464
        %v466 = vadd.f32 %v458, %v465
        %s467 = sld [smem:[#allocation6 + $0x182]]
        %v468 = vstv %s467
        %v469 = vmul.f32 %v362, %v468
        %v470 = vadd.f32 %v462, %v469
        %s471 = sld [smem:[#allocation4 + $0x2]]
        %v472 = vstv %s471
        %v473 = vadd.f32 %v466, %v472
        %s474 = scalar_lea.vmem %s347, 4
        %475 = vst [vmem:[%s474] sm:$0x3] %v473
        %s476 = sld [smem:[#allocation7 + $0x2]]
        %v477 = vstv %s476
        %v478 = vadd.f32 %v470, %v477
        %s479 = scalar_lea.vmem %s355, 4
        %480 = vst [vmem:[%s479] sm:$0x3] %v478
        %s481 = sld [smem:[#allocation2 + $0x3]]
        %v482 = vstv %s481
        %v483 = vmul.f32 %v356, %v482
        %s484 = sld [smem:[#allocation6 + $0x3]]
        %v485 = vstv %s484
        %v486 = vmul.f32 %v356, %v485
        %s487 = sld [smem:[#allocation2 + $0x83]]
        %v488 = vstv %s487
        %v489 = vmul.f32 %v358, %v488
        %v490 = vadd.f32 %v483, %v489
        %s491 = sld [smem:[#allocation6 + $0x83]]
        %v492 = vstv %s491
        %v493 = vmul.f32 %v358, %v492
        %v494 = vadd.f32 %v486, %v493
        %s495 = sld [smem:[#allocation2 + $0x103]]
        %v496 = vstv %s495
        %v497 = vmul.f32 %v360, %v496
        %v498 = vadd.f32 %v490, %v497
        %s499 = sld [smem:[#allocation6 + $0x103]]
        %v500 = vstv %s499
        %v501 = vmul.f32 %v360, %v500
        %v502 = vadd.f32 %v494, %v501
        %s503 = sld [smem:[#allocation2 + $0x183]]
        %v504 = vstv %s503
        %v505 = vmul.f32 %v362, %v504
        %v506 = vadd.f32 %v498, %v505
        %s507 = sld [smem:[#allocation6 + $0x183]]
        %v508 = vstv %s507
        %v509 = vmul.f32 %v362, %v508
        %v510 = vadd.f32 %v502, %v509
        %s511 = sld [smem:[#allocation4 + $0x3]]
        %v512 = vstv %s511
        %v513 = vadd.f32 %v506, %v512
        %s514 = scalar_lea.vmem %s347, 6
        %515 = vst [vmem:[%s514] sm:$0x3] %v513
        %s516 = sld [smem:[#allocation7 + $0x3]]
        %v517 = vstv %s516
        %v518 = vadd.f32 %v510, %v517
        %s519 = scalar_lea.vmem %s355, 6
        %520 = vst [vmem:[%s519] sm:$0x3] %v518
        %p521 = scmp.lt.s32.totalorder %s25, 1
        %s522 = scalar_select %p521, %s25, 1
        %p523 = scmp.lt.s32.totalorder %s26, 0
        %s524 = scalar_select %p523, %s26, 0
        %s525 = smul.addr %s522, 4
        %s526 = sadd.s32 %s524, %s525
        %s527 = smul.addr %s526, 2
        %s528 = scalar_lea.vmem %s5, %s527
        %p529 = scmp.lt.s32.totalorder %s25, 1
        %s530 = scalar_select %p529, %s25, 1
        %p531 = scmp.lt.s32.totalorder %s26, 0
        %s532 = scalar_select %p531, %s26, 0
        %s533 = smul.addr %s530, 4
        %s534 = sadd.s32 %s532, %s533
        %s535 = smul.addr %s534, 2
        %s536 = scalar_lea.vmem %s6, %s535
        // Predicated region
        $region57: #{abcd_forward.1} parent=39 // pred_check
          %p537 = pneg %p165
        $region58: #{abcd_forward.1} parent=39 // pred_check_branch
          %539 = sbr.rel (%p537) target = $region60
        $region59: #{abcd_forward.1} parent=39 // pred_region
          _
        $region60: #{abcd_forward.1} parent=39 // pred_fallthru
          _
        // Predicated region
        $region61: #{abcd_forward.1} parent=39 // pred_check
          %p540 = pneg %p193
        $region62: #{abcd_forward.1} parent=39 // pred_check_branch
          %542 = sbr.rel (%p540) target = $region64
        $region63: #{abcd_forward.1} parent=39 // pred_region
          _
        $region64: #{abcd_forward.1} parent=39 // pred_fallthru
          _
      $region40: #{abcd_forward.1} parent=5 // pred_fallthru
        _
      %p543 = scmp.le.s32.totalorder 2, %s16
      // Predicated region
      $region65: #{abcd_forward.1} parent=5 // pred_check
        %p544 = pneg %p543
      $region66: #{abcd_forward.1} parent=5 // pred_check_branch
        %546 = sbr.rel (%p544) target = $region68
      $region67: #{abcd_forward.1} parent=5 // pred_region
        %s547 = ssub.s32 %s16, 2
        // Predicated region
        $region69: #{abcd_forward.1} parent=67 // pred_check
          %p548 = pneg %p171
        $region70: #{abcd_forward.1} parent=67 // pred_check_branch
          %550 = sbr.rel (%p548) target = $region72
        $region71: #{abcd_forward.1} parent=67 // pred_region
          %p551 = scmp.lt.s32.totalorder %s27, 1
          %s552 = scalar_select %p551, %s27, 1
          %p553 = scmp.lt.s32.totalorder %s28, 0
          %s554 = scalar_select %p553, %s28, 0
          %s555 = smul.addr %s552, 4
          %s556 = sadd.s32 %s554, %s555
          %s557 = smul.addr %s556, 2
          %s558 = scalar_lea.vmem %s5, %s557
        $region72: #{abcd_forward.1} parent=67 // pred_fallthru
          _
        // Predicated region
        $region73: #{abcd_forward.1} parent=67 // pred_check
          %p559 = pneg %p199
        $region74: #{abcd_forward.1} parent=67 // pred_check_branch
          %561 = sbr.rel (%p559) target = $region76
        $region75: #{abcd_forward.1} parent=67 // pred_region
          %p562 = scmp.lt.s32.totalorder %s27, 1
          %s563 = scalar_select %p562, %s27, 1
          %p564 = scmp.lt.s32.totalorder %s28, 0
          %s565 = scalar_select %p564, %s28, 0
          %s566 = smul.addr %s563, 4
          %s567 = sadd.s32 %s565, %s566
          %s568 = smul.addr %s567, 2
          %s569 = scalar_lea.vmem %s6, %s568
        $region76: #{abcd_forward.1} parent=67 // pred_fallthru
          _
      $region68: #{abcd_forward.1} parent=5 // pred_fallthru
        _
    $region6: #{abcd_forward.1} parent=1 // loop_footer
      %s20 = sadd.s32 1, %s16
    $region7: #{abcd_forward.1} parent=1 // loop_footer_branch
      %15 = sbr.rel target = $region3
    $region8: #{abcd_forward.1} parent=1 // loop_exit
      _
    %570 = vsyncpa [#allocation3], 1
    %s571 = scalar_lea.sflag [#allocation3], 1
    %572 = vsyncpa %s571, 1
    %573 = vsyncpa [#allocation5], 1
    %574 = vsyncpa [#allocation8], 1

</llo_original>
